<compile_context>
chip_gen: v7x
topology: tpu7x:2x2x1
jax: 0.10.0
libtpu: 0.0.40
codegen_flags: <defaults>
</compile_context>

<pallas_src>
import functools

import jax
import jax.numpy as jnp
from jax.experimental import pallas as pl
from jax.experimental.pallas import tpu as pltpu

_NEG_FILL = -1e30  # bias fill for padded label columns (drives exp(.) to 0)
_TRANS_B = (((1,), (1,)), ((), ()))  # reference-only: x[m,k] @ w[n,k]^T


def _round_up(n, m):
    return ((n + m - 1) // m) * m


def _mlp_logsoftmax_kernel(x_ref, w1_ref, b1_ref, w2_ref, b2_ref, o_ref):
    # linear1 (x @ w1t) -> ReLU -> linear2 (h @ w2t) -> log_softmax, all in VMEM.
    x = x_ref[...].astype(jnp.bfloat16)                          # f32 stream, VPU cast
    h = jnp.dot(x, w1_ref[...],
                preferred_element_type=jnp.float32) + b1_ref[...]  # [tb, Hp] f32
    h = jnp.maximum(h, 0.0)                                      # .clamp(min=0)
    logits = jnp.dot(h.astype(jnp.bfloat16), w2_ref[...],
                     preferred_element_type=jnp.float32) + b2_ref[...]  # [tb, Lp] f32
    # Numerically-stable log_softmax over the (padded) label axis.  Padded columns
    # carry the -1e30 bias: exp underflows to 0 there, max/sum exact for real labels.
    m = jnp.max(logits, axis=-1, keepdims=True)                  # XLU
    s = logits - m
    lse = jnp.log(jnp.sum(jnp.exp(s), axis=-1, keepdims=True))   # EUP + XLU
    o_ref[...] = (s - lse).astype(o_ref.dtype)


def prepare_params(w1, b1, w2, b2):
    """Pack PyTorch-layout nn.Linear params for the kernel (run once at init).

    w1: [H, In], b1: [H], w2: [L, H], b2: [L].
    Returns bf16 weights pre-transposed to [In, Hp] / [Hp, Lp] (hidden & label
    dims zero-/neg-padded to multiples of 128) and f32 biases shaped [1, dim].
    """
    H, In = w1.shape
    L = w2.shape[0]
    Hp = _round_up(max(H, 1), 128)
    Lp = _round_up(max(L, 1), 128)
    w1t = jnp.zeros((In, Hp), jnp.bfloat16).at[:, :H].set(
        jnp.asarray(w1, jnp.bfloat16).T)                               # [In, Hp]
    b1p = jnp.zeros((1, Hp), jnp.float32).at[0, :H].set(
        jnp.asarray(b1, jnp.float32))                                  # [1, Hp]
    w2t = jnp.zeros((Hp, Lp), jnp.bfloat16).at[:H, :L].set(
        jnp.asarray(w2, jnp.bfloat16).T)                               # [Hp, Lp]
    b2p = jnp.full((1, Lp), _NEG_FILL, jnp.float32).at[0, :L].set(
        jnp.asarray(b2, jnp.float32))                                  # [1, Lp]
    return w1t, b1p, w2t, b2p


def _choose_block_batch(B):
    # Small batches: one tile, rounded up to a sublane multiple of 8.
    if B <= 256:
        return _round_up(B, 8)
    # Large batches: big tiles amortize the ~0.35us/step grid overhead and keep
    # long M streams feeding the MXU, but cap so (a) the grid always has >= 2
    # blocks (v7x megacore shards the "parallel" batch axis over both TCs) and
    # (b) the f32 x / out tiles stay tiny vs. the 32 MiB scoped VMEM budget.
    return min(2048, _round_up(pl.cdiv(B, 2), 256))


@functools.partial(jax.jit,
                   static_argnames=("num_labels", "block_batch", "out_dtype"))
def simple_classifier_forward(x, w1t, b1p, w2t, b2p, *, num_labels,
                              block_batch=None, out_dtype=jnp.float32):
    """x: [B, In] float32.  Params from prepare_params().  Returns [B, num_labels]."""
    B, In = x.shape
    Hp = w1t.shape[1]
    Lp = w2t.shape[1]

    if block_batch is None:
        tb = _choose_block_batch(B)
    else:
        if block_batch <= 0 or block_batch % 8 != 0:
            raise ValueError(
                f"block_batch must be a positive multiple of 8, got {block_batch}")
        tb = block_batch
    n_blocks = pl.cdiv(B, tb)   # ragged last tile is masked by Pallas (no jnp.pad)

    cost = pl.CostEstimate(
        flops=2 * B * (In * Hp + Hp * Lp),
        transcendentals=B * Lp,  # exp in the softmax
        bytes_accessed=(B * In * 4 + In * Hp * 2 + Hp * 4 + Hp * Lp * 2 + Lp * 4
                        + B * Lp * jnp.dtype(out_dtype).itemsize),
    )

    out = pl.pallas_call(
        _mlp_logsoftmax_kernel,
        out_shape=jax.ShapeDtypeStruct((B, Lp), out_dtype),
        grid_spec=pltpu.PrefetchScalarGridSpec(
            num_scalar_prefetch=0,
            grid=(n_blocks,),
            in_specs=[
                pl.BlockSpec((tb, In), lambda i: (i, 0)),   # x tile (f32, cast in-kernel)
                pl.BlockSpec((In, Hp), lambda i: (0, 0)),   # w1t (resident)
                pl.BlockSpec((1, Hp), lambda i: (0, 0)),    # b1
                pl.BlockSpec((Hp, Lp), lambda i: (0, 0)),   # w2t (resident)
                pl.BlockSpec((1, Lp), lambda i: (0, 0)),    # b2 (padded cols = -1e30)
            ],
            out_specs=pl.BlockSpec((tb, Lp), lambda i: (i, 0)),  # lane-dense store
        ),
        compiler_params=pltpu.CompilerParams(
            dimension_semantics=("parallel",),   # shards batch tiles on v7x's 2 TCs
        ),
        cost_estimate=cost,
    )(x, w1t, b1p, w2t, b2p)

    return out[:, :num_labels]


def _torch_like_linear_init(key, out_features, in_features):
    # nn.Linear default: U(-1/sqrt(fan_in), 1/sqrt(fan_in)) for weight and bias.
    kw, kb = jax.random.split(key)
    bound = 1.0 / (in_features ** 0.5)
    w = jax.random.uniform(kw, (out_features, in_features), jnp.float32,
                           minval=-bound, maxval=bound)
    b = jax.random.uniform(kb, (out_features,), jnp.float32,
                           minval=-bound, maxval=bound)
    return w, b


if __name__ == "__main__":
    # Small shapes consistent with the module's forward.
    batch = 8
    input_size = 32
    hidden_size = 64
    num_labels = 16

    key = jax.random.PRNGKey(0)
    kx, k1, k2 = jax.random.split(key, 3)

    x = jax.random.normal(kx, (batch, input_size), dtype=jnp.float32)
    w1, b1 = _torch_like_linear_init(k1, hidden_size, input_size)
    w2, b2 = _torch_like_linear_init(k2, num_labels, hidden_size)

    w1t, b1p, w2t, b2p = prepare_params(w1, b1, w2, b2)
    out = simple_classifier_forward(x, w1t, b1p, w2t, b2p, num_labels=num_labels)
    out = jax.block_until_ready(out)
    assert out.shape == (batch, num_labels)

    # Reference with matching bf16-input / f32-accumulate matmuls (tight check).
    xb = x.astype(jnp.bfloat16)
    h_ref = jnp.maximum(
        jax.lax.dot_general(xb, w1.astype(jnp.bfloat16), _TRANS_B,
                            preferred_element_type=jnp.float32) + b1, 0.0)
    logits_ref = jax.lax.dot_general(
        h_ref.astype(jnp.bfloat16), w2.astype(jnp.bfloat16), _TRANS_B,
        preferred_element_type=jnp.float32) + b2
    ref = jax.nn.log_softmax(logits_ref, axis=1)
    assert jnp.max(jnp.abs(out - ref)) < 1e-4, float(jnp.max(jnp.abs(out - ref)))

    # Loose check against the exact f32 PyTorch math (bf16 MXU inputs in kernel).
    ref32 = jax.nn.log_softmax(jnp.maximum(x @ w1.T + b1, 0.0) @ w2.T + b2, axis=1)
    assert jnp.max(jnp.abs(out - ref32)) < 5e-2, float(jnp.max(jnp.abs(out - ref32)))

    print("KERNEL_OK")
</pallas_src>

<mosaic_0001>
module attributes {stable_mosaic.version = 11 : i64} {
  func.func @_mlp_logsoftmax_kernel(%arg0: i32, %arg1: memref<8x32xf32, #tpu.memory_space<vmem>>, %arg2: memref<32x128xbf16, #tpu.memory_space<vmem>>, %arg3: memref<1x128xf32, #tpu.memory_space<vmem>>, %arg4: memref<128x128xbf16, #tpu.memory_space<vmem>>, %arg5: memref<1x128xf32, #tpu.memory_space<vmem>>, %arg6: memref<8x128xf32, #tpu.memory_space<vmem>>) attributes {dimension_semantics = [#tpu.dimension_semantics<parallel>], iteration_bounds = array<i64: 1>, scalar_prefetch = 0 : i64, scratch_operands = 0 : i64, tpu.core_type = #tpu.core_type<tc>, window_params = [{transform_indices = @transform_0, window_bounds = array<i64: 8, 32>}, {pipeline_mode = #tpu.pipeline_mode<synchronous>, transform_indices = @transform_1, window_bounds = array<i64: 32, 128>}, {pipeline_mode = #tpu.pipeline_mode<synchronous>, transform_indices = @transform_2, window_bounds = array<i64: 1, 128>}, {pipeline_mode = #tpu.pipeline_mode<synchronous>, transform_indices = @transform_3, window_bounds = array<i64: 128, 128>}, {pipeline_mode = #tpu.pipeline_mode<synchronous>, transform_indices = @transform_4, window_bounds = array<i64: 1, 128>}, {transform_indices = @transform_5, window_bounds = array<i64: 8, 128>}]} {
    %c0 = arith.constant 0 : index
    %c0_0 = arith.constant 0 : index
    %0 = vector.load %arg1[%c0, %c0_0] : memref<8x32xf32, #tpu.memory_space<vmem>>, vector<8x32xf32>
    %1 = arith.truncf %0 : vector<8x32xf32> to vector<8x32xbf16>
    %c0_1 = arith.constant 0 : index
    %c0_2 = arith.constant 0 : index
    %2 = vector.load %arg2[%c0_1, %c0_2] : memref<32x128xbf16, #tpu.memory_space<vmem>>, vector<32x128xbf16>
    %cst = arith.constant dense<0.000000e+00> : vector<8x128xf32>
    %3 = tpu.matmul %1, %2, %cst {dimension_numbers = #tpu.dot_dimension_numbers<[1], [0], [0], [1], [0, 0, 1, 1], [], []>} : vector<8x32xbf16>, vector<32x128xbf16>, vector<8x128xf32> -> vector<8x128xf32>
    %c0_3 = arith.constant 0 : index
    %c0_4 = arith.constant 0 : index
    %4 = vector.load %arg3[%c0_3, %c0_4] : memref<1x128xf32, #tpu.memory_space<vmem>>, vector<1x128xf32>
    %5 = vector.broadcast %4 : vector<1x128xf32> to vector<8x128xf32>
    %6 = arith.addf %3, %5 : vector<8x128xf32>
    %cst_5 = arith.constant 0.000000e+00 : f32
    %7 = vector.broadcast %cst_5 : f32 to vector<8x128xf32>
    %8 = arith.maximumf %6, %7 : vector<8x128xf32>
    %9 = arith.truncf %8 : vector<8x128xf32> to vector<8x128xbf16>
    %c0_6 = arith.constant 0 : index
    %c0_7 = arith.constant 0 : index
    %10 = vector.load %arg4[%c0_6, %c0_7] : memref<128x128xbf16, #tpu.memory_space<vmem>>, vector<128x128xbf16>
    %cst_8 = arith.constant dense<0.000000e+00> : vector<8x128xf32>
    %11 = tpu.matmul %9, %10, %cst_8 {dimension_numbers = #tpu.dot_dimension_numbers<[1], [0], [0], [1], [0, 0, 1, 1], [], []>} : vector<8x128xbf16>, vector<128x128xbf16>, vector<8x128xf32> -> vector<8x128xf32>
    %c0_9 = arith.constant 0 : index
    %c0_10 = arith.constant 0 : index
    %12 = vector.load %arg5[%c0_9, %c0_10] : memref<1x128xf32, #tpu.memory_space<vmem>>, vector<1x128xf32>
    %13 = vector.broadcast %12 : vector<1x128xf32> to vector<8x128xf32>
    %14 = arith.addf %11, %13 : vector<8x128xf32>
    %cst_11 = arith.constant dense<0xFF800000> : vector<8xf32>
    %15 = vector.multi_reduction <maximumf>, %14, %cst_11 [1] : vector<8x128xf32> to vector<8xf32>
    %16 = vector.shape_cast %15 : vector<8xf32> to vector<8x1xf32>
    %17 = vector.broadcast %16 : vector<8x1xf32> to vector<8x128xf32>
    %18 = arith.subf %14, %17 : vector<8x128xf32>
    %19 = math.exp %18 : vector<8x128xf32>
    %cst_12 = arith.constant dense<0.000000e+00> : vector<8xf32>
    %20 = vector.multi_reduction <add>, %19, %cst_12 [1] : vector<8x128xf32> to vector<8xf32>
    %21 = vector.shape_cast %20 : vector<8xf32> to vector<8x1xf32>
    %22 = math.log %21 : vector<8x1xf32>
    %23 = vector.broadcast %22 : vector<8x1xf32> to vector<8x128xf32>
    %24 = arith.subf %18, %23 : vector<8x128xf32>
    %c0_13 = arith.constant 0 : index
    %c0_14 = arith.constant 0 : index
    %25 = vector.load %arg6[%c0_13, %c0_14] : memref<8x128xf32, #tpu.memory_space<vmem>>, vector<8x128xf32>
    tpu.vector_store %arg6[%c0_13, %c0_14], %24 {strides = array<i32>} : memref<8x128xf32, #tpu.memory_space<vmem>>, vector<8x128xf32>,
    return
  }
  func.func @transform_0(%arg0: i32) -> (i32, i32) {
    %c0_i32 = arith.constant 0 : i32
    %c0_i32_0 = arith.constant 0 : i32
    return %arg0, %c0_i32 : i32, i32
  }
  func.func @transform_1(%arg0: i32) -> (i32, i32) {
    %c0_i32 = arith.constant 0 : i32
    %c0_i32_0 = arith.constant 0 : i32
    %c0_i32_1 = arith.constant 0 : i32
    return %c0_i32, %c0_i32_0 : i32, i32
  }
  func.func @transform_2(%arg0: i32) -> (i32, i32) {
    %c0_i32 = arith.constant 0 : i32
    %c0_i32_0 = arith.constant 0 : i32
    %c0_i32_1 = arith.constant 0 : i32
    return %c0_i32, %c0_i32_0 : i32, i32
  }
  func.func @transform_3(%arg0: i32) -> (i32, i32) {
    %c0_i32 = arith.constant 0 : i32
    %c0_i32_0 = arith.constant 0 : i32
    %c0_i32_1 = arith.constant 0 : i32
    return %c0_i32, %c0_i32_0 : i32, i32
  }
  func.func @transform_4(%arg0: i32) -> (i32, i32) {
    %c0_i32 = arith.constant 0 : i32
    %c0_i32_0 = arith.constant 0 : i32
    %c0_i32_1 = arith.constant 0 : i32
    return %c0_i32, %c0_i32_0 : i32, i32
  }
  func.func @transform_5(%arg0: i32) -> (i32, i32) {
    %c0_i32 = arith.constant 0 : i32
    %c0_i32_0 = arith.constant 0 : i32
    return %arg0, %c0_i32 : i32, i32
  }
}

</mosaic_0001>

<llo_original>
// kernel: simple_classifier_forward.1
$region0: #{simple_classifier_forward.1}
  #allocation0 [shape = 'u32[]', space=smem, size = 0x4, offset = 0x4, fixed_abs, tag = 'smem constant byte address 0x4 - core index']
  #allocation1 [shape = 'u32[144,128]{1,0:T(1,128)}', space=vmem, size = 0x12000, scoped, tag = 'internal scratch']
  %s0 = inlined_call_operand.hbm [shape: f32[8,32], index: 0, kind: input, shape index: {}]
  %s1 = inlined_call_operand.hbm [shape: bf16[32,128], index: 1, kind: input, shape index: {}]
  %s2 = inlined_call_operand.vmem [shape: f32[1,128], index: 2, kind: input, shape index: {}]
  %s3 = inlined_call_operand.hbm [shape: bf16[128,128], index: 3, kind: input, shape index: {}]
  %s4 = inlined_call_operand.vmem [shape: f32[1,128], index: 4, kind: input, shape index: {}]
  %s5 = inlined_call_operand.hbm [shape: f32[8,128], index: 5, kind: output, shape index: {}]
  %s6 = sld [smem:[#allocation0]]
  $region42: #{simple_classifier_forward.1} parent=0
    _
  %s8 = ssub.s32 1, %s6
  %s9 = scalar_select 0, %s8, %s6
  $region1: #{simple_classifier_forward.1} parent=0
    #allocation2 [shape = 'u8[4096]{0}', space=vmem, size = 0x1000, scoped, tag = 'input window, operand 0, single buffered']
    #allocation3 [shape = 's32[1]{0}', space=sflag, size = 0x4, scoped, tag = 'scoped memory for simple_classifier_forward.1']
    #allocation4 [shape = 's32[1]{0}', space=sflag, size = 0x4, scoped, tag = 'scoped memory for simple_classifier_forward.1']
    #allocation5 [shape = 'u8[8192]{0}', space=vmem, size = 0x2000, scoped, tag = 'input window, operand 1, single buffered']
    #allocation6 [shape = 's32[1]{0}', space=sflag, size = 0x4, scoped, tag = 'scoped memory for simple_classifier_forward.1']
    #allocation7 [shape = 'u8[32768]{0}', space=vmem, size = 0x8000, scoped, tag = 'input window, operand 3, single buffered']
    #allocation8 [shape = 'u8[4096]{0}', space=vmem, size = 0x1000, scoped, tag = 'output window, operand 0, single buffered']
    %10 = vsyncpa [#allocation3], 0
    %11 = vsyncpa [#allocation6], 0
    %12 = vsyncpa [#allocation4], 0
    // Predicated region
    $region2: #{simple_classifier_forward.1} parent=1 // pred_check
      _
    $region3: #{simple_classifier_forward.1} parent=1 // pred_check_branch
      %14 = sbr.rel (0) target = $region5
    $region4: #{simple_classifier_forward.1} parent=1 // pred_region
      %s16 = ssub.s32 128, 128
      %17 = vsyncadd [#allocation3], %s16
      %s19 = sshll.u32 [#allocation2], 4
      %s20 = int_to_ptr.vmem [resolvable:$true] %s19
      %22 = dma.hbm_to_vmem [thread:$0]  %s0, 128, %s20, [#allocation3]
    $region5: #{simple_classifier_forward.1} parent=1 // pred_fallthru
      _
    // Predicated region
    $region6: #{simple_classifier_forward.1} parent=1 // pred_check
      _
    $region7: #{simple_classifier_forward.1} parent=1 // pred_check_branch
      %24 = sbr.rel (0) target = $region9
    $region8: #{simple_classifier_forward.1} parent=1 // pred_region
      %s26 = ssub.s32 256, 256
      %27 = vsyncadd [#allocation6], %s26
      %s28 = sshll.u32 [#allocation5], 4
      %s29 = int_to_ptr.vmem [resolvable:$true] %s28
      %34 = dma.hbm_to_vmem [thread:$0]  %s1, 256, %s29, [#allocation6], 64, 64, 4
    $region9: #{simple_classifier_forward.1} parent=1 // pred_fallthru
      _
    // Predicated region
    $region10: #{simple_classifier_forward.1} parent=1 // pred_check
      _
    $region11: #{simple_classifier_forward.1} parent=1 // pred_check_branch
      %36 = sbr.rel (0) target = $region13
    $region12: #{simple_classifier_forward.1} parent=1 // pred_region
      _
    $region13: #{simple_classifier_forward.1} parent=1 // pred_fallthru
      _
    // Predicated region
    $region14: #{simple_classifier_forward.1} parent=1 // pred_check
      _
    $region15: #{simple_classifier_forward.1} parent=1 // pred_check_branch
      %38 = sbr.rel (0) target = $region17
    $region16: #{simple_classifier_forward.1} parent=1 // pred_region
      %s40 = ssub.s32 1024, 1024
      %41 = vsyncadd [#allocation6], %s40
      %s42 = sshll.u32 [#allocation7], 4
      %s43 = int_to_ptr.vmem [resolvable:$true] %s42
      %48 = dma.hbm_to_vmem [thread:$0]  %s3, 1024, %s43, [#allocation6], 64, 64, 4
    $region17: #{simple_classifier_forward.1} parent=1 // pred_fallthru
      _
    // Predicated region
    $region18: #{simple_classifier_forward.1} parent=1 // pred_check
      _
    $region19: #{simple_classifier_forward.1} parent=1 // pred_check_branch
      %50 = sbr.rel (0) target = $region21
    $region20: #{simple_classifier_forward.1} parent=1 // pred_region
      _
    $region21: #{simple_classifier_forward.1} parent=1 // pred_fallthru
      _
    // Predicated region
    $region22: #{simple_classifier_forward.1} parent=1 // pred_check
      _
    $region23: #{simple_classifier_forward.1} parent=1 // pred_check_branch
      %52 = sbr.rel (0) target = $region25
    $region24: #{simple_classifier_forward.1} parent=1 // pred_region
      %53 = dma.done [#allocation3], 128
    $region25: #{simple_classifier_forward.1} parent=1 // pred_fallthru
      _
    // Predicated region
    $region26: #{simple_classifier_forward.1} parent=1 // pred_check
      _
    $region27: #{simple_classifier_forward.1} parent=1 // pred_check_branch
      %55 = sbr.rel (0) target = $region29
    $region28: #{simple_classifier_forward.1} parent=1 // pred_region
      %56 = dma.done [#allocation6], 256
    $region29: #{simple_classifier_forward.1} parent=1 // pred_fallthru
      _
    // Predicated region
    $region30: #{simple_classifier_forward.1} parent=1 // pred_check
      _
    $region31: #{simple_classifier_forward.1} parent=1 // pred_check_branch
      %58 = sbr.rel (0) target = $region33
    $region32: #{simple_classifier_forward.1} parent=1 // pred_region
      %59 = dma.done [#allocation6], 1024
    $region33: #{simple_classifier_forward.1} parent=1 // pred_fallthru
      _
    %v61 = vld [vmem:[#allocation2] sm:$0xff]
    %v62 = vpack.c.bf16 %v61, %v61
    %v63 = vld [vmem:[#allocation5] sm:$0xf]
    %v64 = vld [vmem:[#allocation5 + $0x4] sm:$0xf]
    %v65 = vld [vmem:[#allocation5 + $0x8] sm:$0xf]
    %v66 = vld [vmem:[#allocation5 + $0xc] sm:$0xf]
    %v67 = vld [vmem:[%s2] sm:$0x1]
    %v69 = vlaneseq
    %v70 = vshrl.u32 %v69, 7
    %v71 = vsub.s32 0, %v70
    %v72 = vrot.slane %v67, %v71
    %v78 = vunpack.c.l.b16 %v63
    %v79 = vunpack.c.l.b16 %v64
    %v80 = vunpack.c.l.b16 %v65
    %v81 = vunpack.c.l.b16 %v66
    %v82 = vpack.c.b16 %v79, %v78
    %v83 = vpack.c.b16 %v81, %v80
    %vm86 = vcmask 261120
    %v88 = vsel %vm86, %v62, 0
    %90 = vmatprep.subr.bf16.mxu0 0
    %91 = vmatpush1.bf16.msra.mxu0 %v82
    %92 = vmatprep.subr.bf16.mxu0 0
    %93 = vmatpush1.bf16.msra.mxu0 %v83
    %94 = vmatprep.subr.bf16.mxu0 0
    %95 = vmatpush1.bf16.msra.mxu0 0
    %96 = vmatprep.subr.bf16.mxu0 0
    %97 = vmatpush1.bf16.msra.mxu0 0
    %98 = vmatprep.subr.bf16.mxu0 0
    %99 = vmatpush1.bf16.msra.mxu0 0
    %100 = vmatprep.subr.bf16.mxu0 0
    %101 = vmatpush1.bf16.msra.mxu0 0
    %102 = vmatprep.subr.bf16.mxu0 0
    %103 = vmatpush1.bf16.msra.mxu0 0
    %104 = vmatprep.subr.bf16.mxu0 0
    %105 = vmatpush1.bf16.msra.mxu0 0
    %106 = vmatprep.subr.bf16.mxu0 0
    %107 = vmatpush1.bf16.msra.mxu0 0
    %108 = vmatprep.subr.bf16.mxu0 0
    %109 = vmatpush1.bf16.msra.mxu0 0
    %110 = vmatprep.subr.bf16.mxu0 0
    %111 = vmatpush1.bf16.msra.mxu0 0
    %112 = vmatprep.subr.bf16.mxu0 0
    %113 = vmatpush1.bf16.msra.mxu0 0
    %114 = vmatprep.subr.bf16.mxu0 0
    %115 = vmatpush1.bf16.msra.mxu0 0
    %116 = vmatprep.subr.bf16.mxu0 0
    %117 = vmatpush1.bf16.msra.mxu0 0
    %118 = vmatprep.subr.bf16.mxu0 0
    %119 = vmatpush1.bf16.msra.mxu0 0
    %120 = vmatprep.subr.bf16.mxu0 0
    %121 = vmatpush1.bf16.msra.mxu0 0
    %122 = vmatprep.mubr.bf16.mxu0 0
    %123 = vmatmul.mubr.bf16.gmra.mrb[0].mxu0 %v88
    %v124 = vpop.f32.mrb[0].mxu0
    %v125 = vadd.f32 %v72, %v124
    %v126 = vpop.f32.mrb[0].mxu0
    %v127 = vpop.f32.mrb[0].mxu0
    %v128 = vpop.f32.mrb[0].mxu0
    %129 = vdwg.mxu0
    %v130 = vmax.f32 %v125, 0.0
    %v131 = vpack.c.bf16 %v130, %v130
    %v132 = vld [vmem:[#allocation7] sm:$0xf]
    %v133 = vld [vmem:[#allocation7 + $0x4] sm:$0xf]
    %v134 = vld [vmem:[#allocation7 + $0x8] sm:$0xf]
    %v135 = vld [vmem:[#allocation7 + $0xc] sm:$0xf]
    %v136 = vld [vmem:[#allocation7 + $0x10] sm:$0xf]
    %v137 = vld [vmem:[#allocation7 + $0x14] sm:$0xf]
    %v138 = vld [vmem:[#allocation7 + $0x18] sm:$0xf]
    %v139 = vld [vmem:[#allocation7 + $0x1c] sm:$0xf]
    %v140 = vld [vmem:[#allocation7 + $0x20] sm:$0xf]
    %v141 = vld [vmem:[#allocation7 + $0x24] sm:$0xf]
    %v142 = vld [vmem:[#allocation7 + $0x28] sm:$0xf]
    %v143 = vld [vmem:[#allocation7 + $0x2c] sm:$0xf]
    %v144 = vld [vmem:[#allocation7 + $0x30] sm:$0xf]
    %v145 = vld [vmem:[#allocation7 + $0x34] sm:$0xf]
    %v146 = vld [vmem:[#allocation7 + $0x38] sm:$0xf]
    %v147 = vld [vmem:[#allocation7 + $0x3c] sm:$0xf]
    %v148 = vld [vmem:[%s4] sm:$0x1]
    %v150 = vlaneseq
    %v151 = vshrl.u32 %v150, 7
    %v152 = vsub.s32 0, %v151
    %v153 = vrot.slane %v148, %v152
    %v171 = vunpack.c.l.b16 %v132
    %v172 = vunpack.c.l.b16 %v133
    %v173 = vunpack.c.l.b16 %v134
    %v174 = vunpack.c.l.b16 %v135
    %v175 = vunpack.c.l.b16 %v136
    %v176 = vunpack.c.l.b16 %v137
    %v177 = vunpack.c.l.b16 %v138
    %v178 = vunpack.c.l.b16 %v139
    %v179 = vunpack.c.l.b16 %v140
    %v180 = vunpack.c.l.b16 %v141
    %v181 = vunpack.c.l.b16 %v142
    %v182 = vunpack.c.l.b16 %v143
    %v183 = vunpack.c.l.b16 %v144
    %v184 = vunpack.c.l.b16 %v145
    %v185 = vunpack.c.l.b16 %v146
    %v186 = vunpack.c.l.b16 %v147
    %v187 = vpack.c.b16 %v172, %v171
    %v188 = vpack.c.b16 %v174, %v173
    %v189 = vpack.c.b16 %v176, %v175
    %v190 = vpack.c.b16 %v178, %v177
    %v191 = vpack.c.b16 %v180, %v179
    %v192 = vpack.c.b16 %v182, %v181
    %v193 = vpack.c.b16 %v184, %v183
    %v194 = vpack.c.b16 %v186, %v185
    %203 = vmatprep.subr.bf16.mxu0 0
    %204 = vmatpush1.bf16.msra.mxu0 %v187
    %205 = vmatprep.subr.bf16.mxu0 0
    %206 = vmatpush1.bf16.msra.mxu0 %v188
    %207 = vmatprep.subr.bf16.mxu0 0
    %208 = vmatpush1.bf16.msra.mxu0 %v189
    %209 = vmatprep.subr.bf16.mxu0 0
    %210 = vmatpush1.bf16.msra.mxu0 %v190
    %211 = vmatprep.subr.bf16.mxu0 0
    %212 = vmatpush1.bf16.msra.mxu0 %v191
    %213 = vmatprep.subr.bf16.mxu0 0
    %214 = vmatpush1.bf16.msra.mxu0 %v192
    %215 = vmatprep.subr.bf16.mxu0 0
    %216 = vmatpush1.bf16.msra.mxu0 %v193
    %217 = vmatprep.subr.bf16.mxu0 0
    %218 = vmatpush1.bf16.msra.mxu0 %v194
    %219 = vmatprep.subr.bf16.mxu0 0
    %220 = vmatpush1.bf16.msra.mxu0 0
    %221 = vmatprep.subr.bf16.mxu0 0
    %222 = vmatpush1.bf16.msra.mxu0 0
    %223 = vmatprep.subr.bf16.mxu0 0
    %224 = vmatpush1.bf16.msra.mxu0 0
    %225 = vmatprep.subr.bf16.mxu0 0
    %226 = vmatpush1.bf16.msra.mxu0 0
    %227 = vmatprep.subr.bf16.mxu0 0
    %228 = vmatpush1.bf16.msra.mxu0 0
    %229 = vmatprep.subr.bf16.mxu0 0
    %230 = vmatpush1.bf16.msra.mxu0 0
    %231 = vmatprep.subr.bf16.mxu0 0
    %232 = vmatpush1.bf16.msra.mxu0 0
    %233 = vmatprep.subr.bf16.mxu0 0
    %234 = vmatpush1.bf16.msra.mxu0 0
    %235 = vmatprep.mubr.bf16.mxu0 0
    %236 = vmatmul.mubr.bf16.gmra.mrb[0].mxu0 %v131
    %v237 = vpop.f32.mrb[0].mxu0
    %v238 = vadd.f32 %v153, %v237
    %v239 = vpop.f32.mrb[0].mxu0
    %v240 = vpop.f32.mrb[0].mxu0
    %v241 = vpop.f32.mrb[0].mxu0
    %242 = vdwg.mxu0
    %243 = vmax.xlane.f32.xlu0 %v238
    %v244 = vpop.xlane.xlu0 %243
    %v245 = vsub.f32 %v238, %v244
    %v246 = vmul.f32 %v245, 1.442695
    %v247 = vpow.pop %v246
    %248 = vadd.xlane.f32.xlu0 %v247
    %v249 = vpop.xlane.xlu0 %248
    %v250 = vlog2.pop %v249
    %v251 = vmul.f32 %v250, 0.6931472
    %v252 = vsub.f32 %v245, %v251
    %253 = vst [vmem:[#allocation8] sm:$0xff] %v252
    // Predicated region
    $region34: #{simple_classifier_forward.1} parent=1 // pred_check
      _
    $region35: #{simple_classifier_forward.1} parent=1 // pred_check_branch
      %255 = sbr.rel (0) target = $region37
    $region36: #{simple_classifier_forward.1} parent=1 // pred_region
      %s257 = ssub.s32 128, 128
      %258 = vsyncadd [#allocation4], %s257
      %s260 = sshll.u32 [#allocation8], 4
      %s261 = int_to_ptr.vmem [resolvable:$true] %s260
      %263 = dma.vmem_to_hbm [thread:$0]  %s261, 128, %s5, [#allocation4]
    $region37: #{simple_classifier_forward.1} parent=1 // pred_fallthru
      _
    // Predicated region
    $region38: #{simple_classifier_forward.1} parent=1 // pred_check
      _
    $region39: #{simple_classifier_forward.1} parent=1 // pred_check_branch
      %265 = sbr.rel (0) target = $region41
    $region40: #{simple_classifier_forward.1} parent=1 // pred_region
      %266 = dma.done [#allocation4], 128
    $region41: #{simple_classifier_forward.1} parent=1 // pred_fallthru
      _
    %267 = vsyncpa [#allocation3], 1
    %268 = vsyncpa [#allocation6], 1
    %269 = vsyncpa [#allocation4], 1

</llo_original>
